<compile_context>
chip_gen: v7x
topology: tpu7x:2x2x1
jax: 0.10.0
libtpu: 0.0.40
codegen_flags: <defaults>
</compile_context>

<pallas_src>
import functools

import jax
import jax.numpy as jnp
from jax.experimental import pallas as pl
from jax.experimental.pallas import tpu as pltpu

GAMMA = 2.0      # compile-time 2.0 -> lowered as base*base (no exp/log pow)
LS = 0.1
CLASSES = 18

# Rows per grid step, on the lane axis (must be a multiple of 128 unless it
# covers all of N).  Class-major (18, 32768) f32 is ~3 MiB/buffer, targets
# (1, 32768) i32 ~1 MiB/buffer -> well under scoped-VMEM on all generations.
DEFAULT_TILE_N = 32768


def _focal_ls_kernel(x_ref, t_ref, out_ref, *, n_total, tile_n, mask_tail):
    # x_ref:  (C, tile_n) class-major logits tile (native dtype)
    # t_ref:  (1, tile_n) int32 targets (lane-dense)
    # out_ref:(1, 1) f32 SMEM -> per-tile partial sum of modulated target log-probs
    x = x_ref[...].astype(jnp.float32)                        # (C, tile_n)
    c, tn = x.shape

    # numerically stable log-sum-exp over the class (sublane) axis
    m = jnp.max(x, axis=0, keepdims=True)                     # (1, tile_n)
    shifted = x - m                                           # (C, tile_n)
    lse = jnp.log(jnp.sum(jnp.exp(shifted), axis=0, keepdims=True))  # (1, tile_n)

    # gather shifted[target[n], n] via a class-index one-hot against the target row
    tgt = t_ref[...]                                          # (1, tile_n) int32
    cls_ids = jax.lax.broadcasted_iota(jnp.int32, (c, tn), 0)
    picked_shifted = jnp.sum(jnp.where(cls_ids == tgt, shifted, 0.0),
                             axis=0, keepdims=True)           # (1, tile_n)

    # focal + label-smoothing applied only to the gathered class (1 exp per row)
    picked_logprob = picked_shifted - lse                     # (1, tile_n)
    picked_prob = jnp.exp(picked_logprob)
    base = (1.0 - LS) * picked_prob + LS / CLASSES
    if GAMMA == 2.0:
        mod = base * base
    else:
        mod = base ** GAMMA
    loss = mod * picked_logprob                               # (1, tile_n)

    # NOTE: tail columns of the last (partial) tile were computed on OOB/garbage
    # data (possibly inf/NaN); this select must stay AFTER the math above and
    # BEFORE the sum.  Only emitted when N does not divide evenly into tiles.
    if mask_tail:
        col = pl.program_id(0) * tile_n + jax.lax.broadcasted_iota(
            jnp.int32, (1, tn), 1)
        loss = jnp.where(col < n_total, loss, 0.0)

    out_ref[0, 0] = jnp.sum(loss)


def focal_loss_with_label_smoothing(logits, targets, *, tile_n=DEFAULT_TILE_N):
    """logits: (N, C) float (any float dtype), targets: (N,) int -> scalar f32."""
    n, c = logits.shape
    assert c == CLASSES, "class dim must match CLASSES"

    # Class-major layout: one XLA transpose in the wrapper, after which every
    # kernel byte / vreg is dense on the lane axis.  Targets become one dense row.
    x_cm = logits.T                                           # (C, N), native dtype
    t_row = targets.astype(jnp.int32).reshape(1, n)           # (1, N)

    # Lane-axis tile: multiple of 128, or the full extent for small N.
    if n <= tile_n:
        tile = n
    else:
        tile = max(128, (int(tile_n) // 128) * 128)
    num_tiles = pl.cdiv(n, tile)
    mask_tail = (n % tile) != 0

    kernel = functools.partial(_focal_ls_kernel, n_total=n, tile_n=tile,
                               mask_tail=mask_tail)

    partials = pl.pallas_call(
        kernel,
        out_shape=jax.ShapeDtypeStruct((num_tiles, 1), jnp.float32),
        grid_spec=pltpu.PrefetchScalarGridSpec(
            num_scalar_prefetch=0,
            grid=(num_tiles,),
            in_specs=[
                pl.BlockSpec((c, tile), lambda i: (0, i)),    # class-major logits
                pl.BlockSpec((1, tile), lambda i: (0, i)),    # lane-dense targets
            ],
            out_specs=pl.BlockSpec((1, 1), lambda i: (i, 0),
                                   memory_space=pltpu.SMEM),
        ),
        compiler_params=pltpu.CompilerParams(
            # Per-tile partials are independent -> both v7x TensorCores can run.
            dimension_semantics=("parallel",),
            # Large tiles stay well under v7x's 64 MiB physical VMEM per core.
            vmem_limit_bytes=48 * 1024 * 1024,
        ),
    )(x_cm, t_row)

    # Final mean + negation on num_tiles scalars (cheap, done in JAX).
    return -jnp.sum(partials[:, 0]) / jnp.float32(n)


def _reference(logits, targets):
    log_prob = jax.nn.log_softmax(logits.astype(jnp.float32), axis=-1)
    prob = jnp.exp(log_prob)
    mod = ((1.0 - LS) * prob + LS / CLASSES) ** GAMMA * log_prob
    picked = jnp.take_along_axis(mod, targets[:, None], axis=-1)[:, 0]
    return -jnp.mean(picked)


if __name__ == "__main__":
    key = jax.random.PRNGKey(0)
    k1, k2 = jax.random.split(key)

    # (N=8, default tile)   -> single full-extent tile
    # (N=200, tile_n=128)   -> 2 grid steps incl. a partial, masked last tile
    # (N=200, bf16 logits)  -> exercises native-dtype HBM input + in-kernel f32 cast
    cases = (
        (8, DEFAULT_TILE_N, jnp.float32),
        (200, 128, jnp.float32),
        (200, 128, jnp.bfloat16),
    )
    for n_rows, tile, dtype in cases:
        logits = jax.random.normal(k1, (n_rows, CLASSES), dtype=jnp.float32)
        logits = logits.astype(dtype)
        targets = jax.random.randint(k2, (n_rows,), 0, CLASSES, dtype=jnp.int32)

        loss = focal_loss_with_label_smoothing(logits, targets, tile_n=tile)
        jax.block_until_ready(loss)

        ref = _reference(logits, targets)
        assert jnp.allclose(loss, ref, atol=1e-5, rtol=1e-4), (
            n_rows, tile, dtype, loss, ref)

    print("KERNEL_OK")
</pallas_src>

<mosaic_0001>
module attributes {stable_mosaic.version = 11 : i64} {
  func.func @_focal_ls_kernel(%arg0: i32, %arg1: memref<18x8xf32, #tpu.memory_space<vmem>>, %arg2: memref<1x8xi32, #tpu.memory_space<vmem>>, %arg3: memref<1x1xf32, #tpu.memory_space<smem>>) attributes {dimension_semantics = [#tpu.dimension_semantics<parallel>], iteration_bounds = array<i64: 1>, scalar_prefetch = 0 : i64, scratch_operands = 0 : i64, tpu.core_type = #tpu.core_type<tc>, window_params = [{transform_indices = @transform_0, window_bounds = array<i64: 18, 8>}, {transform_indices = @transform_1, window_bounds = array<i64: 1, 8>}, {transform_indices = @transform_2, window_bounds = array<i64: 1, 1>}]} {
    %c0 = arith.constant 0 : index
    %c0_0 = arith.constant 0 : index
    %0 = vector.load %arg1[%c0, %c0_0] : memref<18x8xf32, #tpu.memory_space<vmem>>, vector<18x8xf32>
    %cst = arith.constant dense<0xFF800000> : vector<8xf32>
    %1 = vector.multi_reduction <maximumf>, %0, %cst [0] : vector<18x8xf32> to vector<8xf32>
    %2 = vector.shape_cast %1 : vector<8xf32> to vector<1x8xf32>
    %3 = vector.broadcast %2 : vector<1x8xf32> to vector<18x8xf32>
    %4 = arith.subf %0, %3 : vector<18x8xf32>
    %5 = math.exp %4 : vector<18x8xf32>
    %cst_1 = arith.constant dense<0.000000e+00> : vector<8xf32>
    %6 = vector.multi_reduction <add>, %5, %cst_1 [0] : vector<18x8xf32> to vector<8xf32>
    %7 = vector.shape_cast %6 : vector<8xf32> to vector<1x8xf32>
    %8 = math.log %7 : vector<1x8xf32>
    %c0_2 = arith.constant 0 : index
    %c0_3 = arith.constant 0 : index
    %9 = vector.load %arg2[%c0_2, %c0_3] : memref<1x8xi32, #tpu.memory_space<vmem>>, vector<1x8xi32>
    %10 = tpu.iota {dimensions = array<i32: 0>} : vector<18x8xi32>
    %11 = vector.broadcast %9 : vector<1x8xi32> to vector<18x8xi32>
    %12 = arith.cmpi eq, %10, %11 : vector<18x8xi32>
    %cst_4 = arith.constant 0.000000e+00 : f32
    %13 = vector.broadcast %cst_4 : f32 to vector<18x8xf32>
    %14 = arith.select %12, %4, %13 : vector<18x8xi1>, vector<18x8xf32>
    %cst_5 = arith.constant dense<0.000000e+00> : vector<8xf32>
    %15 = vector.multi_reduction <add>, %14, %cst_5 [0] : vector<18x8xf32> to vector<8xf32>
    %16 = vector.shape_cast %15 : vector<8xf32> to vector<1x8xf32>
    %17 = arith.subf %16, %8 : vector<1x8xf32>
    %18 = math.exp %17 : vector<1x8xf32>
    %cst_6 = arith.constant 0.899999976 : f32
    %19 = vector.broadcast %cst_6 : f32 to vector<1x8xf32>
    %20 = arith.mulf %19, %18 : vector<1x8xf32>
    %cst_7 = arith.constant 0.00555555569 : f32
    %21 = vector.broadcast %cst_7 : f32 to vector<1x8xf32>
    %22 = arith.addf %20, %21 : vector<1x8xf32>
    %23 = arith.mulf %22, %22 : vector<1x8xf32>
    %24 = arith.mulf %23, %17 : vector<1x8xf32>
    %25 = vector.shape_cast %24 : vector<1x8xf32> to vector<1x1x8xf32>
    %cst_8 = arith.constant dense<0.000000e+00> : vector<1xf32>
    %26 = vector.multi_reduction <add>, %25, %cst_8 [1, 2] : vector<1x1x8xf32> to vector<1xf32>
    %27 = vector.shape_cast %26 : vector<1xf32> to vector<1x1x1xf32>
    %28 = vector.extract %27[0, 0, 0] : f32 from vector<1x1x1xf32>
    %c0_9 = arith.constant 0 : index
    %c0_10 = arith.constant 0 : index
    %29 = memref.load %arg3[%c0_9, %c0_10] : memref<1x1xf32, #tpu.memory_space<smem>>
    memref.store %28, %arg3[%c0_9, %c0_10] : memref<1x1xf32, #tpu.memory_space<smem>>
    return
  }
  func.func @transform_0(%arg0: i32) -> (i32, i32) {
    %c0_i32 = arith.constant 0 : i32
    %c0_i32_0 = arith.constant 0 : i32
    return %c0_i32, %arg0 : i32, i32
  }
  func.func @transform_1(%arg0: i32) -> (i32, i32) {
    %c0_i32 = arith.constant 0 : i32
    %c0_i32_0 = arith.constant 0 : i32
    return %c0_i32, %arg0 : i32, i32
  }
  func.func @transform_2(%arg0: i32) -> (i32, i32) {
    %c0_i32 = arith.constant 0 : i32
    %c0_i32_0 = arith.constant 0 : i32
    return %arg0, %c0_i32 : i32, i32
  }
}

</mosaic_0001>

<llo_original>
// kernel: tpu_custom_call.1
$region0: #{tpu_custom_call.1}
  #allocation0 [shape = 'u32[]', space=smem, size = 0x4, offset = 0x4, fixed_abs, tag = 'smem constant byte address 0x4 - core index']
  #allocation1 [shape = 'u32[144,128]{1,0:T(1,128)}', space=vmem, size = 0x12000, scoped, tag = 'internal scratch']
  %s0 = inlined_call_operand.vmem [shape: f32[18,8], index: 0, kind: input, shape index: {}]
  %s1 = inlined_call_operand.vmem [shape: s32[1,8], index: 1, kind: input, shape index: {}]
  %s2 = inlined_call_operand.hbm [shape: f32[1,1], index: 2, kind: output, shape index: {}]
  %s3 = sld [smem:[#allocation0]]
  $region18: #{tpu_custom_call.1} parent=0
    _
  %s5 = ssub.s32 1, %s3
  %s6 = scalar_select 0, %s5, %s3
  $region1: #{tpu_custom_call.1} parent=0
    #allocation2 [shape = 'u8[512]{0}', space=smem, size = 0x200, scoped, tag = 'output window, operand 0, single buffered']
    #allocation3 [shape = 's32[1]{0}', space=sflag, size = 0x4, scoped, tag = 'scoped memory for tpu_custom_call.1']
    %7 = vsyncpa [#allocation3], 0
    // Predicated region
    $region2: #{tpu_custom_call.1} parent=1 // pred_check
      _
    $region3: #{tpu_custom_call.1} parent=1 // pred_check_branch
      %9 = sbr.rel (0) target = $region5
    $region4: #{tpu_custom_call.1} parent=1 // pred_region
      _
    $region5: #{tpu_custom_call.1} parent=1 // pred_fallthru
      _
    // Predicated region
    $region6: #{tpu_custom_call.1} parent=1 // pred_check
      _
    $region7: #{tpu_custom_call.1} parent=1 // pred_check_branch
      %11 = sbr.rel (0) target = $region9
    $region8: #{tpu_custom_call.1} parent=1 // pred_region
      _
    $region9: #{tpu_custom_call.1} parent=1 // pred_fallthru
      _
    %v12 = vld [vmem:[%s0] sm:$0xff]
    %v13 = vld [vmem:[%s0 + $0x8] sm:$0xff]
    %v14 = vld [vmem:[%s0 + $0x10] sm:$0x3]
    %vm15 = vcmask 64512
    %v16 = vsel %vm15, %v12, -inf
    %v17 = vsel %vm15, %v13, -inf
    %vm18 = vcmask 58368
    %v19 = vsel %vm18, %v14, -inf
    %v20 = vmax.f32 %v16, %v17
    %v21 = vmax.f32 %v20, %v19
    %v22 = vrot.slane %v21, 4
    %v23 = vmax.f32 %v21, %v22
    %v24 = vrot.slane %v23, 2
    %v25 = vmax.f32 %v23, %v24
    %v26 = vrot.slane %v25, 1
    %v27 = vmax.f32 %v25, %v26
    %v28 = vsub.f32 %v12, %v27
    %v29 = vsub.f32 %v13, %v27
    %v30 = vsub.f32 %v14, %v27
    %v31 = vmul.f32 %v28, 1.442695
    %v32 = vpow.pop %v31
    %v33 = vmul.f32 %v29, 1.442695
    %v34 = vpow.pop %v33
    %v35 = vmul.f32 %v30, 1.442695
    %v36 = vpow.pop %v35
    %v37 = vsel %vm15, %v32, 0.0
    %v38 = vsel %vm15, %v34, 0.0
    %v39 = vadd.f32 %v37, %v38
    %v40 = vsel %vm18, %v36, 0.0
    %v41 = vadd.f32 %v39, %v40
    %v42 = vrot.slane %v41, 4
    %v43 = vadd.f32 %v41, %v42
    %v44 = vrot.slane %v43, 2
    %v45 = vadd.f32 %v43, %v44
    %v46 = vrot.slane %v45, 1
    %v47 = vadd.f32 %v45, %v46
    %v48 = vlog2.pop %v47
    %v49 = vmul.f32 %v48, 0.6931472
    %v50 = vld [vmem:[%s1] sm:$0x1]
    %v51 = vlaneseq
    %v52 = vshrl.u32 %v51, 7
    %v53 = vadd.s32 %v52, 8
    %v54 = vadd.s32 %v52, 16
    %v55 = vlaneseq
    %v56 = vshrl.u32 %v55, 7
    %v57 = vsub.s32 0, %v56
    %v58 = vrot.slane %v50, %v57
    %vm59 = vcmp.eq.s32.totalorder %v52, %v58
    %vm60 = vcmp.eq.s32.totalorder %v53, %v58
    %vm61 = vcmp.eq.s32.totalorder %v54, %v58
    %v62 = vsel %vm59, %v28, 0.0
    %v63 = vsel %vm60, %v29, 0.0
    %v64 = vsel %vm61, %v30, 0.0
    %v65 = vsel %vm15, %v62, 0.0
    %v66 = vsel %vm15, %v63, 0.0
    %v67 = vadd.f32 %v65, %v66
    %v68 = vsel %vm18, %v64, 0.0
    %v69 = vadd.f32 %v67, %v68
    %v70 = vrot.slane %v69, 4
    %v71 = vadd.f32 %v69, %v70
    %v72 = vrot.slane %v71, 2
    %v73 = vadd.f32 %v71, %v72
    %v74 = vrot.slane %v73, 1
    %v75 = vadd.f32 %v73, %v74
    %v76 = vsub.f32 %v75, %v49
    %v77 = vmul.f32 %v76, 1.442695
    %v78 = vpow.pop %v77
    %v79 = vmul.f32 %v78, 0.9
    %v80 = vadd.f32 %v79, 0.0055555557
    %v81 = vmul.f32 %v80, %v80
    %v82 = vmul.f32 %v81, %v76
    %vm83 = vcmask 57344
    %v84 = vsel %vm83, %v82, 0.0
    %85 = vadd.xlane.f32.xlu0 %v84
    %v86 = vpop.xlane.xlu0 %85
    %v87 = vrot.slane %v86, 4
    %v88 = vadd.f32 %v86, %v87
    %v89 = vrot.slane %v88, 2
    %v90 = vadd.f32 %v88, %v89
    %v91 = vrot.slane %v90, 1
    %v92 = vadd.f32 %v90, %v91
    %s93 = vtos %v92
    %s94 = scalar_lea.smem [#allocation2], 0
    %95 = sst [smem:[%s94]] %s93
    // Predicated region
    $region10: #{tpu_custom_call.1} parent=1 // pred_check
      _
    $region11: #{tpu_custom_call.1} parent=1 // pred_check_branch
      %97 = sbr.rel (0) target = $region13
    $region12: #{tpu_custom_call.1} parent=1 // pred_region
      %s99 = ssub.s32 16, 16
      %100 = vsyncadd [#allocation3], %s99
      %103 = dma.smem_to_hbm [#allocation2], 16, %s2, [#allocation3]
    $region13: #{tpu_custom_call.1} parent=1 // pred_fallthru
      _
    // Predicated region
    $region14: #{tpu_custom_call.1} parent=1 // pred_check
      _
    $region15: #{tpu_custom_call.1} parent=1 // pred_check_branch
      %105 = sbr.rel (0) target = $region17
    $region16: #{tpu_custom_call.1} parent=1 // pred_region
      %106 = dma.done [#allocation3], 16
    $region17: #{tpu_custom_call.1} parent=1 // pred_fallthru
      _
    %107 = sfence
    %108 = vsyncpa [#allocation3], 1

</llo_original>
